<compile_context>
chip_gen: v5e
topology: v5e:2x2
jax: 0.10.0
libtpu: 0.0.40
codegen_flags: <defaults>
</compile_context>

<pallas_src>
import jax
import jax.numpy as jnp
from jax.experimental import pallas as pl
from jax.experimental.pallas import tpu as pltpu

NUM_ATTRIBUTES = 4
_LANE = 128              # TPU lane width
_MAX_TILE_M = 128 * 1024 # 2 MiB f32 input block; ~5 MiB VMEM w/ double buffering


def _round_up(x, m):
    return ((x + m - 1) // m) * m


def _cdiv(a, b):
    return (a + b - 1) // b


def _mnl_kernel(w_ref, x_ref, out_ref):
    # w_ref : VMEM (F, 1)       linear weights as a column; same block every
    #                           grid step -> stays resident, no re-DMA.
    # x_ref : VMEM (F, TILE_M)  transposed attribute block (lane-dense).
    # out_ref: VMEM (1, TILE_M) utilities for this block (lane-dense stores).
    #
    # Broadcast-multiply on the VPU, then a 4-deep sublane reduction.
    out_ref[...] = jnp.sum(
        x_ref[...] * w_ref[...], axis=0, keepdims=True
    ).astype(out_ref.dtype)


@jax.jit
def reduced_mnl_forward(x_diff, weight):
    """x_diff: (B, A, F) float32; weight: (1, F) float32 (nn.Linear layout).

    Returns utilities_diff: (B, A) float32, matching
    Linear(F->1, bias=False)(x_diff).squeeze(-1).
    """
    B, A, F = x_diff.shape
    assert weight.shape == (1, F)
    M = B * A

    # Layout plumbing in the wrapper: put the big dim (M) on the lane axis.
    # (The XLA transpose costs one extra pass over x in HBM, but buys fully
    # lane-dense DMA slabs and unmasked stores inside the kernel.)
    x_t = jnp.transpose(x_diff.reshape(M, F).astype(jnp.float32))   # (F, M)

    # Adaptive tiling: as few grid steps as possible, minimal padding waste.
    n_tiles = max(1, _cdiv(M, _MAX_TILE_M))
    tile_m = _round_up(_cdiv(M, n_tiles), _LANE)
    m_pad = tile_m * n_tiles
    if m_pad != M:
        # Zero-padded tail columns contribute nothing and are sliced off below.
        x_t = jnp.pad(x_t, ((0, 0), (0, m_pad - M)))

    w_col = weight.reshape(F, 1).astype(jnp.float32)                # (F, 1)

    out = pl.pallas_call(
        _mnl_kernel,
        out_shape=jax.ShapeDtypeStruct((1, m_pad), jnp.float32),
        grid=(n_tiles,),
        in_specs=[
            pl.BlockSpec((F, 1), lambda i: (0, 0)),        # weights, resident
            pl.BlockSpec((F, tile_m), lambda i: (0, i)),   # x block (lane-dense)
        ],
        out_specs=pl.BlockSpec((1, tile_m), lambda i: (0, i)),
        compiler_params=pltpu.CompilerParams(
            # M axis is embarrassingly parallel -> shard across TCs on v7x.
            dimension_semantics=("parallel",),
            # Explicit, v7x-safe VMEM budget (actual usage here ~5 MiB).
            vmem_limit_bytes=32 * 1024 * 1024,
        ),
    )(w_col, x_t)

    # squeeze(-1) equivalent + unflatten back to (B, A).
    return out[0, :M].reshape(B, A)


if __name__ == "__main__":
    # Deterministic inputs (mirrors nn.Linear(4, 1, bias=False) init bounds).
    key = jax.random.PRNGKey(0)
    k_x, k_w = jax.random.split(key)

    batch, num_alternatives = 2, 8
    x_diff = jax.random.normal(
        k_x, (batch, num_alternatives, NUM_ATTRIBUTES), dtype=jnp.float32
    )
    bound = 1.0 / (NUM_ATTRIBUTES ** 0.5)
    weight = jax.random.uniform(
        k_w, (1, NUM_ATTRIBUTES), minval=-bound, maxval=bound, dtype=jnp.float32
    )

    utilities_diff = reduced_mnl_forward(x_diff, weight)
    utilities_diff = jax.block_until_ready(utilities_diff)

    # Correctness check against plain-JAX reference of the torch semantics.
    ref = jnp.squeeze(x_diff @ weight.T, axis=-1)
    assert utilities_diff.shape == (batch, num_alternatives)
    assert jnp.allclose(utilities_diff, ref, atol=1e-5, rtol=1e-5)

    print("KERNEL_OK")
</pallas_src>

<mosaic_0001>
module attributes {stable_mosaic.version = 11 : i64} {
  func.func @_mnl_kernel(%arg0: i32, %arg1: memref<4x1xf32, #tpu.memory_space<vmem>>, %arg2: memref<4x128xf32, #tpu.memory_space<vmem>>, %arg3: memref<1x128xf32, #tpu.memory_space<vmem>>) attributes {dimension_semantics = [#tpu.dimension_semantics<parallel>], iteration_bounds = array<i64: 1>, scalar_prefetch = 0 : i64, scratch_operands = 0 : i64, tpu.core_type = #tpu.core_type<tc>, window_params = [{pipeline_mode = #tpu.pipeline_mode<synchronous>, transform_indices = @transform_0, window_bounds = array<i64: 4, 1>}, {transform_indices = @transform_1, window_bounds = array<i64: 4, 128>}, {transform_indices = @transform_2, window_bounds = array<i64: 1, 128>}]} {
    %c0 = arith.constant 0 : index
    %c0_0 = arith.constant 0 : index
    %0 = vector.load %arg2[%c0, %c0_0] : memref<4x128xf32, #tpu.memory_space<vmem>>, vector<4x128xf32>
    %c0_1 = arith.constant 0 : index
    %c0_2 = arith.constant 0 : index
    %1 = vector.load %arg1[%c0_1, %c0_2] : memref<4x1xf32, #tpu.memory_space<vmem>>, vector<4x1xf32>
    %2 = vector.broadcast %1 : vector<4x1xf32> to vector<4x128xf32>
    %3 = arith.mulf %0, %2 : vector<4x128xf32>
    %cst = arith.constant dense<0.000000e+00> : vector<128xf32>
    %4 = vector.multi_reduction <add>, %3, %cst [0] : vector<4x128xf32> to vector<128xf32>
    %5 = vector.shape_cast %4 : vector<128xf32> to vector<1x128xf32>
    %c0_3 = arith.constant 0 : index
    %c0_4 = arith.constant 0 : index
    %6 = vector.load %arg3[%c0_3, %c0_4] : memref<1x128xf32, #tpu.memory_space<vmem>>, vector<1x128xf32>
    tpu.vector_store %arg3[%c0_3, %c0_4], %5 {strides = array<i32>} : memref<1x128xf32, #tpu.memory_space<vmem>>, vector<1x128xf32>,
    return
  }
  func.func @transform_0(%arg0: i32) -> (i32, i32) {
    %c0_i32 = arith.constant 0 : i32
    %c0_i32_0 = arith.constant 0 : i32
    %c0_i32_1 = arith.constant 0 : i32
    return %c0_i32, %c0_i32_0 : i32, i32
  }
  func.func @transform_1(%arg0: i32) -> (i32, i32) {
    %c0_i32 = arith.constant 0 : i32
    %c0_i32_0 = arith.constant 0 : i32
    return %c0_i32, %arg0 : i32, i32
  }
  func.func @transform_2(%arg0: i32) -> (i32, i32) {
    %c0_i32 = arith.constant 0 : i32
    %c0_i32_0 = arith.constant 0 : i32
    return %c0_i32, %arg0 : i32, i32
  }
}

</mosaic_0001>

<llo_original>
// kernel: squeeze.1
$region0: #{squeeze.1}
  %s0 = inlined_call_operand.vmem [shape: f32[16], index: 0, kind: input, shape index: {}]
  %s1 = inlined_call_operand.hbm [shape: f32[2,8], index: 1, kind: output, shape index: {}]
  $region1: #{squeeze.1} parent=0
    #allocation0 [shape = 'u8[1024]{0}', space=vmem, size = 0x400, scoped, tag = 'operand span for operand 1']
    #allocation1 [shape = 's32[1]{0}', space=sflag, size = 0x4, scoped, tag = 'scoped memory for squeeze.1']
    #allocation2 [shape = 'u8[4096]{0}', space=vmem, size = 0x1000, scoped, tag = 'scoped mem for output reshape']
    #allocation3 [shape = 'u8[4096]{0}', space=vmem, size = 0x1000, scoped, tag = 'scoped mem for input reshape']
    %2 = vsyncpa [#allocation1], 0
    %s4 = ssub.s32 2, 1
    %v5 = vld [vmem:[%s0] sm:%s4]
    %6 = vst [vmem:[#allocation3] sm:%s4] %v5
    %v7 = vld [vmem:[#allocation3] sm:$0x1]
    %vm8 = vcmask 64512
    %9 = vst.msk [vmem:[#allocation2] sm:$0x1] %vm8, %v7
    %v10 = vld [vmem:[#allocation3] sm:$0x1]
    %11 = vrot.lane.b32.xlu0 %v10, 120
    %v12 = vpop.permute.xlu0 %11
    %vm13 = vcmask 64512
    %s14 = scalar_lea.vmem [#allocation2], 1
    %15 = vst.msk [vmem:[%s14] sm:$0x1] %vm13, %v12
    %s17 = ssub.s32 4, 1
    %v18 = vld [vmem:[#allocation2] sm:%s17]
    %s20 = ssub.s32 4, 1
    %21 = vst [vmem:[#allocation0] sm:%s20] %v18
    %23 = vsyncadd [#allocation1], 0
    %s25 = sshll.u32 [#allocation0], 4
    %s26 = int_to_ptr.vmem [resolvable:$true] %s25
    %s27 = sshll.u32 %s1, 4
    %s28 = int_to_ptr.hbm [resolvable:$true] %s27
    %30 = dma.vmem_to_hbm [thread:$0]  %s26, 32, %s28, [#allocation1]
    %32 = dma.done [#allocation1], 32
    %33 = vsyncpa [#allocation1], 1

// kernel: reduced_mnl_forward.1
$region0: #{reduced_mnl_forward.1}
  #allocation0 [shape = 'u32[]', space=smem, size = 0x4, offset = 0x4, fixed_abs, tag = 'smem constant byte address 0x4 - core index']
  #allocation1 [shape = 'u32[72,128]{1,0:T(1,128)}', space=vmem, size = 0x9000, scoped, tag = 'internal scratch']
  %s0 = inlined_call_operand.vmem [shape: f32[4,1], index: 0, kind: input, shape index: {}]
  %s1 = inlined_call_operand.vmem [shape: f32[4,128], index: 1, kind: input, shape index: {}]
  %s2 = inlined_call_operand.vmem [shape: f32[1,128], index: 2, kind: output, shape index: {}]
  %s3 = sld [smem:[#allocation0]]
  $region18: #{reduced_mnl_forward.1} parent=0
    _
  %s5 = ssub.s32 1, %s3
  %s6 = scalar_select 0, %s5, %s3
  // Predicated region
  $region2: #{reduced_mnl_forward.1} parent=0 // pred_check
    _
  $region3: #{reduced_mnl_forward.1} parent=0 // pred_check_branch
    %8 = sbr.rel (0) target = $region5
  $region4: #{reduced_mnl_forward.1} parent=0 // pred_region
    _
  $region5: #{reduced_mnl_forward.1} parent=0 // pred_fallthru
    _
  // Predicated region
  $region6: #{reduced_mnl_forward.1} parent=0 // pred_check
    _
  $region7: #{reduced_mnl_forward.1} parent=0 // pred_check_branch
    %10 = sbr.rel (0) target = $region9
  $region8: #{reduced_mnl_forward.1} parent=0 // pred_region
    _
  $region9: #{reduced_mnl_forward.1} parent=0 // pred_fallthru
    _
  %v11 = vld [vmem:[%s1] sm:$0xf]
  %v12 = vld [vmem:[%s0] sm:$0xf]
  %14 = vset.pattern.permute.xlu0 0
  %15 = vperm.xlu0 %14, %v12
  %v16 = vpop.permute.xlu0 %15
  %v18 = vmul.f32 %v11, %v16
  %vm19 = vcmask 1043456
  %v20 = vsel %vm19, %v18, 0.0
  %v21 = vrot.slane %v20, 4
  %v22 = vadd.f32 %v20, %v21
  %v23 = vrot.slane %v22, 2
  %v24 = vadd.f32 %v22, %v23
  %v25 = vrot.slane %v24, 1
  %v26 = vadd.f32 %v24, %v25
  %27 = vst [vmem:[%s2] sm:$0x1] %v26
  // Predicated region
  $region10: #{reduced_mnl_forward.1} parent=0 // pred_check
    _
  $region11: #{reduced_mnl_forward.1} parent=0 // pred_check_branch
    %29 = sbr.rel (0) target = $region13
  $region12: #{reduced_mnl_forward.1} parent=0 // pred_region
    _
  $region13: #{reduced_mnl_forward.1} parent=0 // pred_fallthru
    _
  // Predicated region
  $region14: #{reduced_mnl_forward.1} parent=0 // pred_check
    _
  $region15: #{reduced_mnl_forward.1} parent=0 // pred_check_branch
    %31 = sbr.rel (0) target = $region17
  $region16: #{reduced_mnl_forward.1} parent=0 // pred_region
    _
  $region17: #{reduced_mnl_forward.1} parent=0 // pred_fallthru
    _

</llo_original>
